<compile_context>
chip_gen: v6e
topology: v6e:2x2x1
jax: 0.10.0
libtpu: 0.0.40
codegen_flags: <defaults>
</compile_context>

<pallas_src>
import functools

import jax
import jax.numpy as jnp
from jax.experimental import pallas as pl
from jax.experimental.pallas import tpu as pltpu


def _round_up(x, m):
    return (x + m - 1) // m * m


def _mdn_kernel(x_ref, w_in_ref, b_in_ref, w_h_ref, b_h_ref,
                w_out_ref, b_out_ref, p_ref, *, n_hidden_layers):
    """One batch tile, feature-major layout (batch on the 128-lane axis).

    x_ref:     (n_in, TB)
    w_in_ref:  (H, n_in)      b_in_ref:  (H, 1)
    w_h_ref:   (L, H, H)      b_h_ref:   (L, H, 1)
    w_out_ref: (n_out, H)     b_out_ref: (n_out, 1)
    p_ref:     (n_out, TB)    -- softmax probabilities (feature-major)
    """
    x = x_ref[...]

    # ---- input layer: one small MXU matmul (K = n_in is tiny; padding the
    # contraction dim is free and avoids per-k sub-vreg loads + broadcasts).
    h = jnp.tanh(
        jnp.dot(w_in_ref[...], x, preferred_element_type=jnp.float32)
        + b_in_ref[...])

    # ---- hidden layers (H x H): MXU matmuls, f32 accumulation.
    for l in range(n_hidden_layers):
        h = jnp.tanh(
            jnp.dot(w_h_ref[l], h, preferred_element_type=jnp.float32)
            + b_h_ref[l])

    # ---- output layer + numerically-stable softmax over the feature
    # (sublane) axis. Exact reciprocal (still a single EUP op per tile) so
    # each column sums to 1 to f32 precision.
    logits = (jnp.dot(w_out_ref[...], h, preferred_element_type=jnp.float32)
              + b_out_ref[...])
    m = jnp.max(logits, axis=0, keepdims=True)
    e = jnp.exp(logits - m)
    denom = jnp.sum(e, axis=0, keepdims=True)
    p_ref[...] = (e * pl.reciprocal(denom, approx=False)).astype(p_ref.dtype)


def classification_mdn_forward(x, params, *, n_hidden_layers, batch_tile=4096):
    """Pallas-backed forward. x: (B, n_input) f32 -> (B, n_output) probs."""
    w_in, b_in, w_h, b_h, w_out, b_out = params
    B, n_in = x.shape
    n_out = w_out.shape[0]

    # Batch goes on the 128-lane axis. Tile choice:
    #   * at most `batch_tile` lanes per tile (fat tiles amortize the
    #     per-grid-step overhead; VMEM footprint stays tiny),
    #   * but at least 2 tiles for moderate B so the "parallel" grid axis can
    #     shard across v7x's two TensorCores.
    tb = min(_round_up(batch_tile, 128), _round_up(pl.cdiv(B, 2), 128))
    grid = (pl.cdiv(B, tb),)

    # Tiny (n_in x B) transpose; no padding -- the ragged last block is
    # handled by Pallas (partial writes masked, padded columns discarded).
    xt = x.T

    kernel = functools.partial(_mdn_kernel, n_hidden_layers=n_hidden_layers)

    pt = pl.pallas_call(
        kernel,
        out_shape=jax.ShapeDtypeStruct((n_out, B), jnp.float32),
        grid=grid,
        in_specs=[
            pl.BlockSpec((n_in, tb), lambda i: (0, i)),    # x tile (pipelined)
            pl.BlockSpec(w_in.shape, lambda i: (0, 0)),    # weights: resident
            pl.BlockSpec(b_in.shape, lambda i: (0, 0)),
            pl.BlockSpec(w_h.shape, lambda i: (0, 0, 0)),
            pl.BlockSpec(b_h.shape, lambda i: (0, 0, 0)),
            pl.BlockSpec(w_out.shape, lambda i: (0, 0)),
            pl.BlockSpec(b_out.shape, lambda i: (0, 0)),
        ],
        out_specs=pl.BlockSpec((n_out, tb), lambda i: (0, i)),
        compiler_params=pltpu.CompilerParams(
            dimension_semantics=("parallel",)),            # 2 TCs on v7x
    )(xt, w_in, b_in, w_h, b_h, w_out, b_out)

    return pt.T   # (B, n_out) batch-major, matching the PyTorch module.


def init_params(key, n_input, n_output, n_hidden_units, n_hidden_layers):
    """Deterministic synthetic params in PyTorch-native (out, in) layout."""
    ks = jax.random.split(key, 6)
    s = 0.3
    w_in = s * jax.random.normal(ks[0], (n_hidden_units, n_input), jnp.float32)
    b_in = s * jax.random.normal(ks[1], (n_hidden_units, 1), jnp.float32)
    w_h = s * jax.random.normal(
        ks[2], (n_hidden_layers, n_hidden_units, n_hidden_units), jnp.float32)
    b_h = s * jax.random.normal(
        ks[3], (n_hidden_layers, n_hidden_units, 1), jnp.float32)
    w_out = s * jax.random.normal(ks[4], (n_output, n_hidden_units), jnp.float32)
    b_out = s * jax.random.normal(ks[5], (n_output, 1), jnp.float32)
    return (w_in, b_in, w_h, b_h, w_out, b_out)


def reference_forward(x, params, n_hidden_layers):
    """Pure-JAX reference mirroring the PyTorch module (batch-major)."""
    w_in, b_in, w_h, b_h, w_out, b_out = params
    h = jnp.tanh(x @ w_in.T + b_in.T)
    for l in range(n_hidden_layers):
        h = jnp.tanh(h @ w_h[l].T + b_h[l].T)
    logits = h @ w_out.T + b_out.T
    return jax.nn.softmax(logits, axis=1)


def _run_case(key, batch, n_input, n_output, n_hidden_units, n_hidden_layers):
    kx, kp = jax.random.split(key)
    x = jax.random.normal(kx, (batch, n_input), jnp.float32)
    params = init_params(kp, n_input, n_output, n_hidden_units, n_hidden_layers)

    p_hat = classification_mdn_forward(x, params,
                                       n_hidden_layers=n_hidden_layers)
    p_hat = jax.block_until_ready(p_hat)

    p_ref = reference_forward(x, params, n_hidden_layers)
    assert p_hat.shape == (batch, n_output)
    assert jnp.allclose(p_hat, p_ref, atol=1e-3, rtol=1e-3), "mismatch vs reference"
    # Exact reciprocal in the epilogue -> rows sum to 1 to f32 precision.
    assert jnp.allclose(jnp.sum(p_hat, axis=1), 1.0, atol=1e-3)


if __name__ == "__main__":
    key = jax.random.PRNGKey(0)
    k1, k2 = jax.random.split(key)

    # Case 1: module defaults (n_input=2, n_output=2, H=10, L=1), tiny batch.
    _run_case(k1, batch=8, n_input=2, n_output=2,
              n_hidden_units=10, n_hidden_layers=1)

    # Case 2: larger ragged batch + deeper net -> exercises >= 2 batch tiles
    # (v7x megacore path) and the ragged (unpadded) last block.
    _run_case(k2, batch=1000, n_input=3, n_output=5,
              n_hidden_units=16, n_hidden_layers=2)

    print("KERNEL_OK")
</pallas_src>

<mosaic_0001>
module attributes {stable_mosaic.version = 11 : i64} {
  func.func @_mdn_kernel(%arg0: i32, %arg1: memref<2x128xf32, #tpu.memory_space<vmem>>, %arg2: memref<10x2xf32, #tpu.memory_space<vmem>>, %arg3: memref<10x1xf32, #tpu.memory_space<vmem>>, %arg4: memref<1x10x10xf32, #tpu.memory_space<vmem>>, %arg5: memref<1x10x1xf32, #tpu.memory_space<vmem>>, %arg6: memref<2x10xf32, #tpu.memory_space<vmem>>, %arg7: memref<2x1xf32, #tpu.memory_space<vmem>>, %arg8: memref<2x128xf32, #tpu.memory_space<vmem>>) attributes {dimension_semantics = [#tpu.dimension_semantics<parallel>], iteration_bounds = array<i64: 1>, scalar_prefetch = 0 : i64, scratch_operands = 0 : i64, tpu.core_type = #tpu.core_type<tc>, window_params = [{transform_indices = @transform_0, window_bounds = array<i64: 2, 128>}, {pipeline_mode = #tpu.pipeline_mode<synchronous>, transform_indices = @transform_1, window_bounds = array<i64: 10, 2>}, {pipeline_mode = #tpu.pipeline_mode<synchronous>, transform_indices = @transform_2, window_bounds = array<i64: 10, 1>}, {pipeline_mode = #tpu.pipeline_mode<synchronous>, transform_indices = @transform_3, window_bounds = array<i64: 1, 10, 10>}, {pipeline_mode = #tpu.pipeline_mode<synchronous>, transform_indices = @transform_4, window_bounds = array<i64: 1, 10, 1>}, {pipeline_mode = #tpu.pipeline_mode<synchronous>, transform_indices = @transform_5, window_bounds = array<i64: 2, 10>}, {pipeline_mode = #tpu.pipeline_mode<synchronous>, transform_indices = @transform_6, window_bounds = array<i64: 2, 1>}, {transform_indices = @transform_7, window_bounds = array<i64: 2, 128>}]} {
    %c0 = arith.constant 0 : index
    %c0_0 = arith.constant 0 : index
    %0 = vector.load %arg1[%c0, %c0_0] : memref<2x128xf32, #tpu.memory_space<vmem>>, vector<2x128xf32>
    %c0_1 = arith.constant 0 : index
    %c0_2 = arith.constant 0 : index
    %1 = vector.load %arg2[%c0_1, %c0_2] : memref<10x2xf32, #tpu.memory_space<vmem>>, vector<10x2xf32>
    %cst = arith.constant dense<0.000000e+00> : vector<10x128xf32>
    %2 = tpu.matmul %1, %0, %cst {dimension_numbers = #tpu.dot_dimension_numbers<[1], [0], [0], [1], [0, 0, 1, 1], [], []>} : vector<10x2xf32>, vector<2x128xf32>, vector<10x128xf32> -> vector<10x128xf32>
    %c0_3 = arith.constant 0 : index
    %c0_4 = arith.constant 0 : index
    %3 = vector.load %arg3[%c0_3, %c0_4] : memref<10x1xf32, #tpu.memory_space<vmem>>, vector<10x1xf32>
    %4 = vector.broadcast %3 : vector<10x1xf32> to vector<10x128xf32>
    %5 = arith.addf %2, %4 : vector<10x128xf32>
    %6 = math.tanh %5 : vector<10x128xf32>
    %c0_5 = arith.constant 0 : index
    %c0_6 = arith.constant 0 : index
    %c0_7 = arith.constant 0 : index
    %7 = vector.load %arg4[%c0_5, %c0_6, %c0_7] : memref<1x10x10xf32, #tpu.memory_space<vmem>>, vector<1x10x10xf32>
    %8 = vector.shape_cast %7 : vector<1x10x10xf32> to vector<10x10xf32>
    %cst_8 = arith.constant dense<0.000000e+00> : vector<10x128xf32>
    %9 = tpu.matmul %8, %6, %cst_8 {dimension_numbers = #tpu.dot_dimension_numbers<[1], [0], [0], [1], [0, 0, 1, 1], [], []>} : vector<10x10xf32>, vector<10x128xf32>, vector<10x128xf32> -> vector<10x128xf32>
    %c0_9 = arith.constant 0 : index
    %c0_10 = arith.constant 0 : index
    %c0_11 = arith.constant 0 : index
    %10 = vector.load %arg5[%c0_9, %c0_10, %c0_11] : memref<1x10x1xf32, #tpu.memory_space<vmem>>, vector<1x10x1xf32>
    %11 = vector.shape_cast %10 : vector<1x10x1xf32> to vector<10x1xf32>
    %12 = vector.broadcast %11 : vector<10x1xf32> to vector<10x128xf32>
    %13 = arith.addf %9, %12 : vector<10x128xf32>
    %14 = math.tanh %13 : vector<10x128xf32>
    %c0_12 = arith.constant 0 : index
    %c0_13 = arith.constant 0 : index
    %15 = vector.load %arg6[%c0_12, %c0_13] : memref<2x10xf32, #tpu.memory_space<vmem>>, vector<2x10xf32>
    %cst_14 = arith.constant dense<0.000000e+00> : vector<2x128xf32>
    %16 = tpu.matmul %15, %14, %cst_14 {dimension_numbers = #tpu.dot_dimension_numbers<[1], [0], [0], [1], [0, 0, 1, 1], [], []>} : vector<2x10xf32>, vector<10x128xf32>, vector<2x128xf32> -> vector<2x128xf32>
    %c0_15 = arith.constant 0 : index
    %c0_16 = arith.constant 0 : index
    %17 = vector.load %arg7[%c0_15, %c0_16] : memref<2x1xf32, #tpu.memory_space<vmem>>, vector<2x1xf32>
    %18 = vector.broadcast %17 : vector<2x1xf32> to vector<2x128xf32>
    %19 = arith.addf %16, %18 : vector<2x128xf32>
    %cst_17 = arith.constant dense<0xFF800000> : vector<128xf32>
    %20 = vector.multi_reduction <maximumf>, %19, %cst_17 [0] : vector<2x128xf32> to vector<128xf32>
    %21 = vector.shape_cast %20 : vector<128xf32> to vector<1x128xf32>
    %22 = vector.broadcast %21 : vector<1x128xf32> to vector<2x128xf32>
    %23 = arith.subf %19, %22 : vector<2x128xf32>
    %24 = math.exp %23 : vector<2x128xf32>
    %cst_18 = arith.constant dense<0.000000e+00> : vector<128xf32>
    %25 = vector.multi_reduction <add>, %24, %cst_18 [0] : vector<2x128xf32> to vector<128xf32>
    %26 = vector.shape_cast %25 : vector<128xf32> to vector<1x128xf32>
    %27 = tpu.reciprocal %26 : vector<1x128xf32> -> vector<1x128xf32>
    %28 = vector.broadcast %27 : vector<1x128xf32> to vector<2x128xf32>
    %29 = arith.mulf %24, %28 : vector<2x128xf32>
    %c0_19 = arith.constant 0 : index
    %c0_20 = arith.constant 0 : index
    %30 = vector.load %arg8[%c0_19, %c0_20] : memref<2x128xf32, #tpu.memory_space<vmem>>, vector<2x128xf32>
    tpu.vector_store %arg8[%c0_19, %c0_20], %29 {strides = array<i32>} : memref<2x128xf32, #tpu.memory_space<vmem>>, vector<2x128xf32>,
    return
  }
  func.func @transform_0(%arg0: i32) -> (i32, i32) {
    %c0_i32 = arith.constant 0 : i32
    %c0_i32_0 = arith.constant 0 : i32
    return %c0_i32, %arg0 : i32, i32
  }
  func.func @transform_1(%arg0: i32) -> (i32, i32) {
    %c0_i32 = arith.constant 0 : i32
    %c0_i32_0 = arith.constant 0 : i32
    %c0_i32_1 = arith.constant 0 : i32
    return %c0_i32, %c0_i32_0 : i32, i32
  }
  func.func @transform_2(%arg0: i32) -> (i32, i32) {
    %c0_i32 = arith.constant 0 : i32
    %c0_i32_0 = arith.constant 0 : i32
    %c0_i32_1 = arith.constant 0 : i32
    return %c0_i32, %c0_i32_0 : i32, i32
  }
  func.func @transform_3(%arg0: i32) -> (i32, i32, i32) {
    %c0_i32 = arith.constant 0 : i32
    %c0_i32_0 = arith.constant 0 : i32
    %c0_i32_1 = arith.constant 0 : i32
    %c0_i32_2 = arith.constant 0 : i32
    return %c0_i32, %c0_i32_0, %c0_i32_1 : i32, i32, i32
  }
  func.func @transform_4(%arg0: i32) -> (i32, i32, i32) {
    %c0_i32 = arith.constant 0 : i32
    %c0_i32_0 = arith.constant 0 : i32
    %c0_i32_1 = arith.constant 0 : i32
    %c0_i32_2 = arith.constant 0 : i32
    return %c0_i32, %c0_i32_0, %c0_i32_1 : i32, i32, i32
  }
  func.func @transform_5(%arg0: i32) -> (i32, i32) {
    %c0_i32 = arith.constant 0 : i32
    %c0_i32_0 = arith.constant 0 : i32
    %c0_i32_1 = arith.constant 0 : i32
    return %c0_i32, %c0_i32_0 : i32, i32
  }
  func.func @transform_6(%arg0: i32) -> (i32, i32) {
    %c0_i32 = arith.constant 0 : i32
    %c0_i32_0 = arith.constant 0 : i32
    %c0_i32_1 = arith.constant 0 : i32
    return %c0_i32, %c0_i32_0 : i32, i32
  }
  func.func @transform_7(%arg0: i32) -> (i32, i32) {
    %c0_i32 = arith.constant 0 : i32
    %c0_i32_0 = arith.constant 0 : i32
    return %c0_i32, %arg0 : i32, i32
  }
}

</mosaic_0001>

<llo_original>
// kernel: tpu_custom_call.1
$region0: #{tpu_custom_call.1}
  #allocation0 [shape = 'u32[]', space=smem, size = 0x4, offset = 0x4, fixed_abs, tag = 'smem constant byte address 0x4 - core index']
  #allocation1 [shape = 'u32[144,128]{1,0:T(1,128)}', space=vmem, size = 0x12000, scoped, tag = 'internal scratch']
  %s0 = inlined_call_operand.vmem [shape: f32[2,8], index: 0, kind: input, shape index: {}]
  %s1 = inlined_call_operand.vmem [shape: f32[10,2], index: 1, kind: input, shape index: {}]
  %s2 = inlined_call_operand.vmem [shape: f32[10,1], index: 2, kind: input, shape index: {}]
  %s3 = inlined_call_operand.vmem [shape: f32[1,10,10], index: 3, kind: input, shape index: {}]
  %s4 = inlined_call_operand.vmem [shape: f32[1,10,1], index: 4, kind: input, shape index: {}]
  %s5 = inlined_call_operand.vmem [shape: f32[2,10], index: 5, kind: input, shape index: {}]
  %s6 = inlined_call_operand.vmem [shape: f32[2,1], index: 6, kind: input, shape index: {}]
  %s7 = inlined_call_operand.hbm [shape: f32[2,8], index: 7, kind: output, shape index: {}]
  %s8 = sld [smem:[#allocation0]]
  $region38: #{tpu_custom_call.1} parent=0
    _
  %s10 = ssub.s32 1, %s8
  %s11 = scalar_select 0, %s10, %s8
  $region1: #{tpu_custom_call.1} parent=0
    #allocation2 [shape = 'u8[1024]{0}', space=vmem, size = 0x400, scoped, tag = 'output window, operand 0, single buffered']
    #allocation3 [shape = 's32[1]{0}', space=sflag, size = 0x4, scoped, tag = 'scoped memory for tpu_custom_call.1']
    %12 = vsyncpa [#allocation3], 0
    // Predicated region
    $region2: #{tpu_custom_call.1} parent=1 // pred_check
      _
    $region3: #{tpu_custom_call.1} parent=1 // pred_check_branch
      %14 = sbr.rel (0) target = $region5
    $region4: #{tpu_custom_call.1} parent=1 // pred_region
      _
    $region5: #{tpu_custom_call.1} parent=1 // pred_fallthru
      _
    // Predicated region
    $region6: #{tpu_custom_call.1} parent=1 // pred_check
      _
    $region7: #{tpu_custom_call.1} parent=1 // pred_check_branch
      %16 = sbr.rel (0) target = $region9
    $region8: #{tpu_custom_call.1} parent=1 // pred_region
      _
    $region9: #{tpu_custom_call.1} parent=1 // pred_fallthru
      _
    // Predicated region
    $region10: #{tpu_custom_call.1} parent=1 // pred_check
      _
    $region11: #{tpu_custom_call.1} parent=1 // pred_check_branch
      %18 = sbr.rel (0) target = $region13
    $region12: #{tpu_custom_call.1} parent=1 // pred_region
      _
    $region13: #{tpu_custom_call.1} parent=1 // pred_fallthru
      _
    // Predicated region
    $region14: #{tpu_custom_call.1} parent=1 // pred_check
      _
    $region15: #{tpu_custom_call.1} parent=1 // pred_check_branch
      %20 = sbr.rel (0) target = $region17
    $region16: #{tpu_custom_call.1} parent=1 // pred_region
      _
    $region17: #{tpu_custom_call.1} parent=1 // pred_fallthru
      _
    // Predicated region
    $region18: #{tpu_custom_call.1} parent=1 // pred_check
      _
    $region19: #{tpu_custom_call.1} parent=1 // pred_check_branch
      %22 = sbr.rel (0) target = $region21
    $region20: #{tpu_custom_call.1} parent=1 // pred_region
      _
    $region21: #{tpu_custom_call.1} parent=1 // pred_fallthru
      _
    // Predicated region
    $region22: #{tpu_custom_call.1} parent=1 // pred_check
      _
    $region23: #{tpu_custom_call.1} parent=1 // pred_check_branch
      %24 = sbr.rel (0) target = $region25
    $region24: #{tpu_custom_call.1} parent=1 // pred_region
      _
    $region25: #{tpu_custom_call.1} parent=1 // pred_fallthru
      _
    // Predicated region
    $region26: #{tpu_custom_call.1} parent=1 // pred_check
      _
    $region27: #{tpu_custom_call.1} parent=1 // pred_check_branch
      %26 = sbr.rel (0) target = $region29
    $region28: #{tpu_custom_call.1} parent=1 // pred_region
      _
    $region29: #{tpu_custom_call.1} parent=1 // pred_fallthru
      _
    %v27 = vld [vmem:[%s0] sm:$0x3]
    %v28 = vld [vmem:[%s1] sm:$0xff]
    %v29 = vld [vmem:[%s1 + $0x8] sm:$0x3]
    %v30 = vld [vmem:[%s2] sm:$0xff]
    %v31 = vld [vmem:[%s2 + $0x8] sm:$0x3]
    %33 = vset.pattern.permute.xlu0 0
    %34 = vperm.xlu0 %33, %v30
    %v35 = vpop.permute.xlu0 %34
    %38 = vset.pattern.permute.xlu0 0
    %39 = vperm.xlu0 %38, %v31
    %v40 = vpop.permute.xlu0 %39
    %vm42 = vcmask 15360
    %v44 = vsel %vm42, %v28, 0
    %v47 = vsel %vm42, %v29, 0
    %vm49 = vcmask 1041408
    %v51 = vsel %vm49, %v27, 0
    %53 = vmatprep.subr.mxu0 0.0
    %54 = vmatpush1.msra.mxu0 0.0
    %55 = vmatprep.subr.mxu0 0.0
    %56 = vmatpush1.msra.mxu0 0.0
    %57 = vmatprep.subr.mxu0 0.0
    %58 = vmatpush1.msra.mxu0 0.0
    %59 = vmatprep.subr.mxu0 0.0
    %60 = vmatpush1.msra.mxu0 0.0
    %61 = vmatprep.subr.mxu0 0.0
    %62 = vmatpush1.msra.mxu0 0.0
    %63 = vmatprep.subr.mxu0 0.0
    %64 = vmatpush1.msra.mxu0 0.0
    %65 = vmatprep.subr.mxu0 0.0
    %66 = vmatpush1.msra.mxu0 0.0
    %67 = vmatprep.subr.mxu0 0.0
    %68 = vmatpush1.msra.mxu0 0.0
    %69 = vmatprep.subr.mxu0 0.0
    %70 = vmatpush1.msra.mxu0 0.0
    %71 = vmatprep.subr.mxu0 0.0
    %72 = vmatpush1.msra.mxu0 0.0
    %73 = vmatprep.subr.mxu0 0.0
    %74 = vmatpush1.msra.mxu0 0.0
    %75 = vmatprep.subr.mxu0 0.0
    %76 = vmatpush1.msra.mxu0 0.0
    %77 = vmatprep.subr.mxu0 0.0
    %78 = vmatpush1.msra.mxu0 0.0
    %79 = vmatprep.subr.mxu0 0.0
    %80 = vmatpush1.msra.mxu0 0.0
    %81 = vmatprep.subr.mxu0 0.0
    %82 = vmatpush1.msra.mxu0 0.0
    %83 = vmatprep.subr.mxu0 0.0
    %84 = vmatpush1.msra.mxu0 %v51
    %85 = vmatprep.subr.mxu0 0.0
    %86 = vmatpush2.msra.mxu0 0.0
    %87 = vmatprep.subr.mxu0 0.0
    %88 = vmatpush2.msra.mxu0 0.0
    %89 = vmatprep.subr.mxu0 0.0
    %90 = vmatpush2.msra.mxu0 0.0
    %91 = vmatprep.subr.mxu0 0.0
    %92 = vmatpush2.msra.mxu0 0.0
    %93 = vmatprep.subr.mxu0 0.0
    %94 = vmatpush2.msra.mxu0 0.0
    %95 = vmatprep.subr.mxu0 0.0
    %96 = vmatpush2.msra.mxu0 0.0
    %97 = vmatprep.subr.mxu0 0.0
    %98 = vmatpush2.msra.mxu0 0.0
    %99 = vmatprep.subr.mxu0 0.0
    %100 = vmatpush2.msra.mxu0 0.0
    %101 = vmatprep.subr.mxu0 0.0
    %102 = vmatpush2.msra.mxu0 0.0
    %103 = vmatprep.subr.mxu0 0.0
    %104 = vmatpush2.msra.mxu0 0.0
    %105 = vmatprep.subr.mxu0 0.0
    %106 = vmatpush2.msra.mxu0 0.0
    %107 = vmatprep.subr.mxu0 0.0
    %108 = vmatpush2.msra.mxu0 0.0
    %109 = vmatprep.subr.mxu0 0.0
    %110 = vmatpush2.msra.mxu0 0.0
    %111 = vmatprep.subr.mxu0 0.0
    %112 = vmatpush2.msra.mxu0 0.0
    %113 = vmatprep.subr.mxu0 0.0
    %114 = vmatpush2.msra.mxu0 0.0
    %115 = vmatprep.subr.mxu0 0.0
    %116 = vmatpush2.msra.mxu0 0.0
    %117 = vmatprep.mubr.f32.mxu0 0.0
    %118 = vmatmul.mubr.f32.gmra.mxu0 %v44
    %v119 = vpop.f32.mrf.mxu0
    %v120 = vadd.f32 %v35, %v119
    %v121 = vpop.f32.mrf.mxu0
    %122 = vmatprep.mubr.f32.mxu0 0.0
    %123 = vmatmul.mubr.f32.gmra.mxu0 %v47
    %v124 = vpop.f32.mrf.mxu0
    %v125 = vadd.f32 %v40, %v124
    %v126 = vpop.f32.mrf.mxu0
    %127 = vdwg.mxu0
    %v128 = vtanh.pop %v120
    %v129 = vtanh.pop %v125
    %v130 = vld [vmem:[%s3] sm:$0xff]
    %v131 = vld [vmem:[%s3 + $0x8] sm:$0x3]
    %v132 = vld [vmem:[%s4] sm:$0xff]
    %v133 = vld [vmem:[%s4 + $0x8] sm:$0x3]
    %135 = vset.pattern.permute.xlu0 0
    %136 = vperm.xlu0 %135, %v132
    %v137 = vpop.permute.xlu0 %136
    %140 = vset.pattern.permute.xlu0 0
    %141 = vperm.xlu0 %140, %v133
    %v142 = vpop.permute.xlu0 %141
    %vm144 = vcmask 80896
    %v146 = vsel %vm144, %v130, 0
    %v149 = vsel %vm144, %v131, 0
    %v152 = vsel %vm49, %v129, 0
    %154 = vmatprep.subr.mxu0 0.0
    %155 = vmatpush1.msra.mxu0 0.0
    %156 = vmatprep.subr.mxu0 0.0
    %157 = vmatpush1.msra.mxu0 0.0
    %158 = vmatprep.subr.mxu0 0.0
    %159 = vmatpush1.msra.mxu0 0.0
    %160 = vmatprep.subr.mxu0 0.0
    %161 = vmatpush1.msra.mxu0 0.0
    %162 = vmatprep.subr.mxu0 0.0
    %163 = vmatpush1.msra.mxu0 0.0
    %164 = vmatprep.subr.mxu0 0.0
    %165 = vmatpush1.msra.mxu0 0.0
    %166 = vmatprep.subr.mxu0 0.0
    %167 = vmatpush1.msra.mxu0 0.0
    %168 = vmatprep.subr.mxu0 0.0
    %169 = vmatpush1.msra.mxu0 0.0
    %170 = vmatprep.subr.mxu0 0.0
    %171 = vmatpush1.msra.mxu0 0.0
    %172 = vmatprep.subr.mxu0 0.0
    %173 = vmatpush1.msra.mxu0 0.0
    %174 = vmatprep.subr.mxu0 0.0
    %175 = vmatpush1.msra.mxu0 0.0
    %176 = vmatprep.subr.mxu0 0.0
    %177 = vmatpush1.msra.mxu0 0.0
    %178 = vmatprep.subr.mxu0 0.0
    %179 = vmatpush1.msra.mxu0 0.0
    %180 = vmatprep.subr.mxu0 0.0
    %181 = vmatpush1.msra.mxu0 0.0
    %182 = vmatprep.subr.mxu0 0.0
    %183 = vmatpush1.msra.mxu0 %v152
    %184 = vmatprep.subr.mxu0 0.0
    %185 = vmatpush1.msra.mxu0 %v128
    %186 = vmatprep.subr.mxu0 0.0
    %187 = vmatpush2.msra.mxu0 0.0
    %188 = vmatprep.subr.mxu0 0.0
    %189 = vmatpush2.msra.mxu0 0.0
    %190 = vmatprep.subr.mxu0 0.0
    %191 = vmatpush2.msra.mxu0 0.0
    %192 = vmatprep.subr.mxu0 0.0
    %193 = vmatpush2.msra.mxu0 0.0
    %194 = vmatprep.subr.mxu0 0.0
    %195 = vmatpush2.msra.mxu0 0.0
    %196 = vmatprep.subr.mxu0 0.0
    %197 = vmatpush2.msra.mxu0 0.0
    %198 = vmatprep.subr.mxu0 0.0
    %199 = vmatpush2.msra.mxu0 0.0
    %200 = vmatprep.subr.mxu0 0.0
    %201 = vmatpush2.msra.mxu0 0.0
    %202 = vmatprep.subr.mxu0 0.0
    %203 = vmatpush2.msra.mxu0 0.0
    %204 = vmatprep.subr.mxu0 0.0
    %205 = vmatpush2.msra.mxu0 0.0
    %206 = vmatprep.subr.mxu0 0.0
    %207 = vmatpush2.msra.mxu0 0.0
    %208 = vmatprep.subr.mxu0 0.0
    %209 = vmatpush2.msra.mxu0 0.0
    %210 = vmatprep.subr.mxu0 0.0
    %211 = vmatpush2.msra.mxu0 0.0
    %212 = vmatprep.subr.mxu0 0.0
    %213 = vmatpush2.msra.mxu0 0.0
    %214 = vmatprep.subr.mxu0 0.0
    %215 = vmatpush2.msra.mxu0 0.0
    %216 = vmatprep.subr.mxu0 0.0
    %217 = vmatpush2.msra.mxu0 0.0
    %218 = vmatprep.mubr.f32.mxu0 0.0
    %219 = vmatmul.mubr.f32.gmra.mxu0 %v146
    %v220 = vpop.f32.mrf.mxu0
    %v221 = vadd.f32 %v137, %v220
    %v222 = vpop.f32.mrf.mxu0
    %223 = vmatprep.mubr.f32.mxu0 0.0
    %224 = vmatmul.mubr.f32.gmra.mxu0 %v149
    %v225 = vpop.f32.mrf.mxu0
    %v226 = vadd.f32 %v142, %v225
    %v227 = vpop.f32.mrf.mxu0
    %228 = vdwg.mxu0
    %v229 = vtanh.pop %v221
    %v230 = vtanh.pop %v226
    %v231 = vld [vmem:[%s5] sm:$0x3]
    %v232 = vld [vmem:[%s6] sm:$0x3]
    %234 = vset.pattern.permute.xlu0 0
    %235 = vperm.xlu0 %234, %v232
    %v236 = vpop.permute.xlu0 %235
    %v239 = vsel %vm144, %v231, 0
    %v242 = vsel %vm49, %v230, 0
    %244 = vmatprep.subr.mxu0 0.0
    %245 = vmatpush1.msra.mxu0 0.0
    %246 = vmatprep.subr.mxu0 0.0
    %247 = vmatpush1.msra.mxu0 0.0
    %248 = vmatprep.subr.mxu0 0.0
    %249 = vmatpush1.msra.mxu0 0.0
    %250 = vmatprep.subr.mxu0 0.0
    %251 = vmatpush1.msra.mxu0 0.0
    %252 = vmatprep.subr.mxu0 0.0
    %253 = vmatpush1.msra.mxu0 0.0
    %254 = vmatprep.subr.mxu0 0.0
    %255 = vmatpush1.msra.mxu0 0.0
    %256 = vmatprep.subr.mxu0 0.0
    %257 = vmatpush1.msra.mxu0 0.0
    %258 = vmatprep.subr.mxu0 0.0
    %259 = vmatpush1.msra.mxu0 0.0
    %260 = vmatprep.subr.mxu0 0.0
    %261 = vmatpush1.msra.mxu0 0.0
    %262 = vmatprep.subr.mxu0 0.0
    %263 = vmatpush1.msra.mxu0 0.0
    %264 = vmatprep.subr.mxu0 0.0
    %265 = vmatpush1.msra.mxu0 0.0
    %266 = vmatprep.subr.mxu0 0.0
    %267 = vmatpush1.msra.mxu0 0.0
    %268 = vmatprep.subr.mxu0 0.0
    %269 = vmatpush1.msra.mxu0 0.0
    %270 = vmatprep.subr.mxu0 0.0
    %271 = vmatpush1.msra.mxu0 0.0
    %272 = vmatprep.subr.mxu0 0.0
    %273 = vmatpush1.msra.mxu0 %v242
    %274 = vmatprep.subr.mxu0 0.0
    %275 = vmatpush1.msra.mxu0 %v229
    %276 = vmatprep.subr.mxu0 0.0
    %277 = vmatpush2.msra.mxu0 0.0
    %278 = vmatprep.subr.mxu0 0.0
    %279 = vmatpush2.msra.mxu0 0.0
    %280 = vmatprep.subr.mxu0 0.0
    %281 = vmatpush2.msra.mxu0 0.0
    %282 = vmatprep.subr.mxu0 0.0
    %283 = vmatpush2.msra.mxu0 0.0
    %284 = vmatprep.subr.mxu0 0.0
    %285 = vmatpush2.msra.mxu0 0.0
    %286 = vmatprep.subr.mxu0 0.0
    %287 = vmatpush2.msra.mxu0 0.0
    %288 = vmatprep.subr.mxu0 0.0
    %289 = vmatpush2.msra.mxu0 0.0
    %290 = vmatprep.subr.mxu0 0.0
    %291 = vmatpush2.msra.mxu0 0.0
    %292 = vmatprep.subr.mxu0 0.0
    %293 = vmatpush2.msra.mxu0 0.0
    %294 = vmatprep.subr.mxu0 0.0
    %295 = vmatpush2.msra.mxu0 0.0
    %296 = vmatprep.subr.mxu0 0.0
    %297 = vmatpush2.msra.mxu0 0.0
    %298 = vmatprep.subr.mxu0 0.0
    %299 = vmatpush2.msra.mxu0 0.0
    %300 = vmatprep.subr.mxu0 0.0
    %301 = vmatpush2.msra.mxu0 0.0
    %302 = vmatprep.subr.mxu0 0.0
    %303 = vmatpush2.msra.mxu0 0.0
    %304 = vmatprep.subr.mxu0 0.0
    %305 = vmatpush2.msra.mxu0 0.0
    %306 = vmatprep.subr.mxu0 0.0
    %307 = vmatpush2.msra.mxu0 0.0
    %308 = vmatprep.mubr.f32.mxu0 0.0
    %309 = vmatmul.mubr.f32.gmra.mxu0 %v239
    %v310 = vpop.f32.mrf.mxu0
    %v311 = vadd.f32 %v236, %v310
    %v312 = vpop.f32.mrf.mxu0
    %313 = vdwg.mxu0
    %v314 = vsel %vm49, %v311, -inf
    %v315 = vrot.slane %v314, 4
    %v316 = vmax.f32 %v314, %v315
    %v317 = vrot.slane %v316, 2
    %v318 = vmax.f32 %v316, %v317
    %v319 = vrot.slane %v318, 1
    %v320 = vmax.f32 %v318, %v319
    %v321 = vsub.f32 %v311, %v320
    %v322 = vmul.f32 %v321, 1.442695
    %v323 = vpow.pop %v322
    %v324 = vsel %vm49, %v323, 0.0
    %v325 = vrot.slane %v324, 4
    %v326 = vadd.f32 %v324, %v325
    %v327 = vrot.slane %v326, 2
    %v328 = vadd.f32 %v326, %v327
    %v329 = vrot.slane %v328, 1
    %v330 = vadd.f32 %v328, %v329
    %v331 = vrcp.pop %v330
    %v332 = vmul.f32 %v323, %v331
    %333 = vst [vmem:[#allocation2] sm:$0x3] %v332
    // Predicated region
    $region30: #{tpu_custom_call.1} parent=1 // pred_check
      _
    $region31: #{tpu_custom_call.1} parent=1 // pred_check_branch
      %335 = sbr.rel (0) target = $region33
    $region32: #{tpu_custom_call.1} parent=1 // pred_region
      %s337 = ssub.s32 32, 32
      %338 = vsyncadd [#allocation3], %s337
      %s340 = sshll.u32 [#allocation2], 4
      %s341 = int_to_ptr.vmem [resolvable:$true] %s340
      %343 = dma.vmem_to_hbm [thread:$0]  %s341, 32, %s7, [#allocation3]
    $region33: #{tpu_custom_call.1} parent=1 // pred_fallthru
      _
    // Predicated region
    $region34: #{tpu_custom_call.1} parent=1 // pred_check
      _
    $region35: #{tpu_custom_call.1} parent=1 // pred_check_branch
      %345 = sbr.rel (0) target = $region37
    $region36: #{tpu_custom_call.1} parent=1 // pred_region
      %346 = dma.done [#allocation3], 32
    $region37: #{tpu_custom_call.1} parent=1 // pred_fallthru
      _
    %347 = vsyncpa [#allocation3], 1

</llo_original>
